<compile_context>
chip_gen: v7x
topology: tpu7x:2x2x1
jax: 0.10.0
libtpu: 0.0.40
codegen_flags: <defaults>
</compile_context>

<pallas_src>
import functools

import jax
import jax.numpy as jnp
from jax.experimental import pallas as pl
from jax.experimental.pallas import tpu as pltpu

_LANE = 128      # pad ONLY the output feature dim to this (lane-dense store)
_SUBLANE = 8     # f32 sublane granularity for the batch tile
_MIN_SPLIT_ROWS = 128   # don't split into <128-row tiles just to feed 2 TCs


def _round_up(x, m):
    return ((x + m - 1) // m) * m


def _choose_batch_tiling(batch, batch_tile):
    """Pick (batch_padded, tile_rows, num_tiles) for the 1-D batch grid."""
    batch_8 = _round_up(batch, _SUBLANE)
    tb_cap = max(_SUBLANE, _round_up(batch_tile, _SUBLANE))
    num_tiles = -(-batch_8 // tb_cap)
    # v7x has 2 TensorCores sharing the "parallel" axis: prefer an even grid
    # length >= 2 once the batch is big enough that the ~0.35us per-step
    # overhead is amortised.  Harmless on single-TC v5e/v6e.
    if num_tiles == 1 and batch_8 >= 2 * _MIN_SPLIT_ROWS:
        num_tiles = 2
    if num_tiles > 1 and num_tiles % 2 == 1:
        num_tiles += 1
    # Derive the tile from the (even) tile count so padded rows stay well
    # below one full tile (no round_up(batch, tb) over-padding).
    tb = _round_up(-(-batch_8 // num_tiles), _SUBLANE)
    return tb * num_tiles, tb, num_tiles


def _resident_spec(block_shape, single_buffer):
    """BlockSpec for weights/biases: constant index_map keeps them resident in
    VMEM across the grid.  For large nets, single-buffer them so default
    double-buffering does not double the resident footprint."""
    index_map = lambda i: (0, 0)
    if single_buffer and hasattr(pl, "Buffered"):
        try:
            return pl.BlockSpec(block_shape, index_map,
                                pipeline_mode=pl.Buffered(1))
        except TypeError:   # jax without pipeline_mode on BlockSpec
            pass
    return pl.BlockSpec(block_shape, index_map)


def _mlp_kernel(n_hidden, final_ac, n_action_valid, mxu_dtype, *refs):
    """Whole-MLP forward for one batch tile.

    refs = (x_ref, w1, b1, w2, b2, ..., wL, bL, o_ref)
    Hidden layers: Linear -> ReLU.  Final layer: Linear (+ optional Softmax
    over the last axis, matching nn.Softmax(dim=-1); padded columns masked).
    """
    x_ref = refs[0]
    o_ref = refs[-1]
    p = refs[1:-1]

    h = x_ref[...].astype(jnp.float32)

    for layer in range(n_hidden + 1):
        w = p[2 * layer][...]
        b = p[2 * layer + 1][...].astype(jnp.float32)
        h = jnp.dot(h.astype(mxu_dtype), w.astype(mxu_dtype),
                    preferred_element_type=jnp.float32) + b
        if layer < n_hidden:
            h = jnp.maximum(h, 0.0)

    out = h
    if final_ac:
        # Padded action columns must not leak into the softmax denominator.
        # Large finite negative (not -inf) keeps exp/sum NaN-safe.
        col = jax.lax.broadcasted_iota(jnp.int32, out.shape, dimension=1)
        out = jnp.where(col < n_action_valid, out, -1e30)
        m = jnp.max(out, axis=-1, keepdims=True)
        e = jnp.exp(out - m)
        out = e / jnp.sum(e, axis=-1, keepdims=True)

    o_ref[...] = out.astype(o_ref.dtype)


def mlp_forward(x, params, *, final_ac=None, batch_tile=512, use_bf16_mxu=None):
    """Q-network forward pass as a single Pallas TPU kernel.

    x: (batch, n_state) float32
    params: list of (W, b) with W: (in, out), b: (1, out) or (out,)
    """
    n_layers = len(params)           # hidden layers + output layer
    n_hidden = n_layers - 1
    batch, n_state = x.shape
    dims = [n_state] + [w.shape[1] for w, _ in params]
    n_action = dims[-1]
    a_pad = _round_up(n_action, _LANE)     # lane-dense output store only

    # bf16 MXU operands only pay once dims/batch are big; stay f32 otherwise.
    if use_bf16_mxu is None:
        use_bf16_mxu = max(dims) >= 512 or batch >= 4096
    mxu_dtype = jnp.bfloat16 if use_bf16_mxu else jnp.float32
    w_itemsize = 2 if use_bf16_mxu else 4

    # ---- batch tiling (no over-padding; even grid for v7x megacore) --------
    batch_p, tb, num_tiles = _choose_batch_tiling(batch, batch_tile)
    x_p = x if batch_p == batch else jnp.pad(x, ((0, batch_p - batch), (0, 0)))

    # ---- params: only the LAST layer's output dim is padded (to a_pad) ------
    flat_params = []
    resident_bytes = 0
    for li, (w, b) in enumerate(params):
        din, dout = w.shape
        dout_p = a_pad if li == n_layers - 1 else dout
        w_p = w.astype(mxu_dtype if use_bf16_mxu else jnp.float32)
        if dout_p != dout:
            w_p = jnp.pad(w_p, ((0, 0), (0, dout_p - dout)))
        b_p = jnp.reshape(b, (1, -1)).astype(jnp.float32)
        if dout_p != dout:
            b_p = jnp.pad(b_p, ((0, 0), (0, dout_p - dout)))
        flat_params += [w_p, b_p]
        resident_bytes += din * dout_p * w_itemsize + dout_p * 4

    # Single-buffer resident weights only when their footprint matters.
    single_buffer_resident = resident_bytes > (1 << 20)
    resident_buf = 1 if single_buffer_resident else 2

    kernel = functools.partial(_mlp_kernel, n_hidden, bool(final_ac),
                               n_action, mxu_dtype)

    # x/out: streamed (double-buffered) per batch tile; weights/biases resident.
    in_specs = [pl.BlockSpec((tb, n_state), lambda i: (i, 0))]
    for li in range(n_layers):
        dout_p = a_pad if li == n_layers - 1 else dims[li + 1]
        in_specs.append(_resident_spec((dims[li], dout_p), single_buffer_resident))
        in_specs.append(_resident_spec((1, dout_p), single_buffer_resident))
    out_spec = pl.BlockSpec((tb, a_pad), lambda i: (i, 0))

    # ---- VMEM budget (v5e default scoped limit is 16 MiB; v7x phys 64 MiB) --
    stream_bytes = 2 * tb * (n_state * x_p.dtype.itemsize + a_pad * 4)
    vmem_needed = resident_bytes * resident_buf + stream_bytes + (4 << 20)
    # TODO(synk): if vmem_needed exceeds ~48 MiB (v7x VMEM is 64 MiB), switch to
    # a K-/layer-tiled grid ("arbitrary" axis) instead of keeping all layers
    # resident; the current design assumes the whole network fits in VMEM.
    vmem_limit = int(min(max(vmem_needed, 32 << 20), 100 << 20))

    flops = 2 * batch_p * sum(
        dims[i] * (a_pad if i == n_layers - 1 else dims[i + 1])
        for i in range(n_layers))
    bytes_accessed = int(x_p.size) * x_p.dtype.itemsize \
        + batch_p * a_pad * 4 + resident_bytes
    transcendentals = batch_p * a_pad if final_ac else 0

    out = pl.pallas_call(
        kernel,
        out_shape=jax.ShapeDtypeStruct((batch_p, a_pad), jnp.float32),
        grid=(num_tiles,),
        in_specs=in_specs,
        out_specs=out_spec,
        compiler_params=pltpu.CompilerParams(
            dimension_semantics=("parallel",),
            vmem_limit_bytes=vmem_limit),
        cost_estimate=pl.CostEstimate(
            flops=int(flops),
            transcendentals=int(transcendentals),
            bytes_accessed=int(bytes_accessed)),
    )(x_p, *flat_params)

    return out[:batch, :n_action]


def init_params(key, n_state, n_action, hidden_sizes, param_dtype=jnp.float32):
    """Kaiming-normal (fan_in, leaky_relu) weights, zero biases — matches
    Net._initialize_weights deterministically."""
    sizes = [n_state] + list(hidden_sizes) + [n_action]
    params = []
    neg_slope = 0.01   # PyTorch default for 'leaky_relu' nonlinearity
    gain = (2.0 / (1.0 + neg_slope ** 2)) ** 0.5
    for i in range(len(sizes) - 1):
        fan_in, fan_out = sizes[i], sizes[i + 1]
        key, sub = jax.random.split(key)
        std = gain / (fan_in ** 0.5)
        w = (std * jax.random.normal(sub, (fan_in, fan_out), dtype=jnp.float32)
             ).astype(param_dtype)
        b = jnp.zeros((1, fan_out), dtype=param_dtype)
        params.append((w, b))
    return params


def mlp_reference(x, params, *, final_ac=None):
    h = x.astype(jnp.float32)
    for w, b in params[:-1]:
        h = jnp.maximum(h @ w.astype(jnp.float32) + b.astype(jnp.float32), 0.0)
    w, b = params[-1]
    out = h @ w.astype(jnp.float32) + b.astype(jnp.float32)
    if final_ac:
        out = jax.nn.softmax(out, axis=-1)
    return out


if __name__ == "__main__":
    # small shapes consistent with Net(n_state, n_action, hidden_sizes)
    batch = 8
    n_state = 32
    n_action = 16
    hidden_sizes = (64, 64)

    key = jax.random.PRNGKey(0)
    key, xkey = jax.random.split(key)
    x = jax.random.normal(xkey, (batch, n_state), dtype=jnp.float32)
    params = init_params(key, n_state, n_action, hidden_sizes)

    # --- module default: no final activation --------------------------------
    out = jax.block_until_ready(mlp_forward(x, params, final_ac=None))
    ref = mlp_reference(x, params, final_ac=None)
    assert out.shape == (batch, n_action)
    assert jnp.allclose(out, ref, atol=1e-4, rtol=1e-4)

    # --- final_ac=True path (Softmax over last axis, padded cols masked) ----
    out_sm = jax.block_until_ready(mlp_forward(x, params, final_ac=True))
    ref_sm = mlp_reference(x, params, final_ac=True)
    assert out_sm.shape == (batch, n_action)
    assert jnp.allclose(out_sm, ref_sm, atol=1e-5, rtol=1e-4)
    assert jnp.allclose(jnp.sum(out_sm, axis=-1), 1.0, atol=1e-5)

    # --- multi-tile batch: exercises even-grid split + edge padding ---------
    key, xkey2 = jax.random.split(key)
    x_big = jax.random.normal(xkey2, (272, n_state), dtype=jnp.float32)
    out_big = jax.block_until_ready(
        mlp_forward(x_big, params, final_ac=None, batch_tile=128))
    ref_big = mlp_reference(x_big, params, final_ac=None)
    assert out_big.shape == (272, n_action)
    assert jnp.allclose(out_big, ref_big, atol=1e-4, rtol=1e-4)

    print("KERNEL_OK")
</pallas_src>

<mosaic_0001>
module attributes {stable_mosaic.version = 11 : i64} {
  func.func @_mlp_kernel(%arg0: i32, %arg1: memref<8x32xf32, #tpu.memory_space<vmem>>, %arg2: memref<32x64xf32, #tpu.memory_space<vmem>>, %arg3: memref<1x64xf32, #tpu.memory_space<vmem>>, %arg4: memref<64x64xf32, #tpu.memory_space<vmem>>, %arg5: memref<1x64xf32, #tpu.memory_space<vmem>>, %arg6: memref<64x128xf32, #tpu.memory_space<vmem>>, %arg7: memref<1x128xf32, #tpu.memory_space<vmem>>, %arg8: memref<8x128xf32, #tpu.memory_space<vmem>>) attributes {dimension_semantics = [#tpu.dimension_semantics<parallel>], iteration_bounds = array<i64: 1>, scalar_prefetch = 0 : i64, scratch_operands = 0 : i64, tpu.core_type = #tpu.core_type<tc>, window_params = [{transform_indices = @transform_0, window_bounds = array<i64: 8, 32>}, {pipeline_mode = #tpu.pipeline_mode<synchronous>, transform_indices = @transform_1, window_bounds = array<i64: 32, 64>}, {pipeline_mode = #tpu.pipeline_mode<synchronous>, transform_indices = @transform_2, window_bounds = array<i64: 1, 64>}, {pipeline_mode = #tpu.pipeline_mode<synchronous>, transform_indices = @transform_3, window_bounds = array<i64: 64, 64>}, {pipeline_mode = #tpu.pipeline_mode<synchronous>, transform_indices = @transform_4, window_bounds = array<i64: 1, 64>}, {pipeline_mode = #tpu.pipeline_mode<synchronous>, transform_indices = @transform_5, window_bounds = array<i64: 64, 128>}, {pipeline_mode = #tpu.pipeline_mode<synchronous>, transform_indices = @transform_6, window_bounds = array<i64: 1, 128>}, {transform_indices = @transform_7, window_bounds = array<i64: 8, 128>}]} {
    %c0 = arith.constant 0 : index
    %c0_0 = arith.constant 0 : index
    %0 = vector.load %arg1[%c0, %c0_0] : memref<8x32xf32, #tpu.memory_space<vmem>>, vector<8x32xf32>
    %c0_1 = arith.constant 0 : index
    %c0_2 = arith.constant 0 : index
    %1 = vector.load %arg2[%c0_1, %c0_2] : memref<32x64xf32, #tpu.memory_space<vmem>>, vector<32x64xf32>
    %c0_3 = arith.constant 0 : index
    %c0_4 = arith.constant 0 : index
    %2 = vector.load %arg3[%c0_3, %c0_4] : memref<1x64xf32, #tpu.memory_space<vmem>>, vector<1x64xf32>
    %cst = arith.constant dense<0.000000e+00> : vector<8x64xf32>
    %3 = tpu.matmul %0, %1, %cst {dimension_numbers = #tpu.dot_dimension_numbers<[1], [0], [0], [1], [0, 0, 1, 1], [], []>} : vector<8x32xf32>, vector<32x64xf32>, vector<8x64xf32> -> vector<8x64xf32>
    %4 = vector.broadcast %2 : vector<1x64xf32> to vector<8x64xf32>
    %5 = arith.addf %3, %4 : vector<8x64xf32>
    %cst_5 = arith.constant 0.000000e+00 : f32
    %6 = vector.broadcast %cst_5 : f32 to vector<8x64xf32>
    %7 = arith.maximumf %5, %6 : vector<8x64xf32>
    %c0_6 = arith.constant 0 : index
    %c0_7 = arith.constant 0 : index
    %8 = vector.load %arg4[%c0_6, %c0_7] : memref<64x64xf32, #tpu.memory_space<vmem>>, vector<64x64xf32>
    %c0_8 = arith.constant 0 : index
    %c0_9 = arith.constant 0 : index
    %9 = vector.load %arg5[%c0_8, %c0_9] : memref<1x64xf32, #tpu.memory_space<vmem>>, vector<1x64xf32>
    %cst_10 = arith.constant dense<0.000000e+00> : vector<8x64xf32>
    %10 = tpu.matmul %7, %8, %cst_10 {dimension_numbers = #tpu.dot_dimension_numbers<[1], [0], [0], [1], [0, 0, 1, 1], [], []>} : vector<8x64xf32>, vector<64x64xf32>, vector<8x64xf32> -> vector<8x64xf32>
    %11 = vector.broadcast %9 : vector<1x64xf32> to vector<8x64xf32>
    %12 = arith.addf %10, %11 : vector<8x64xf32>
    %cst_11 = arith.constant 0.000000e+00 : f32
    %13 = vector.broadcast %cst_11 : f32 to vector<8x64xf32>
    %14 = arith.maximumf %12, %13 : vector<8x64xf32>
    %c0_12 = arith.constant 0 : index
    %c0_13 = arith.constant 0 : index
    %15 = vector.load %arg6[%c0_12, %c0_13] : memref<64x128xf32, #tpu.memory_space<vmem>>, vector<64x128xf32>
    %c0_14 = arith.constant 0 : index
    %c0_15 = arith.constant 0 : index
    %16 = vector.load %arg7[%c0_14, %c0_15] : memref<1x128xf32, #tpu.memory_space<vmem>>, vector<1x128xf32>
    %cst_16 = arith.constant dense<0.000000e+00> : vector<8x128xf32>
    %17 = tpu.matmul %14, %15, %cst_16 {dimension_numbers = #tpu.dot_dimension_numbers<[1], [0], [0], [1], [0, 0, 1, 1], [], []>} : vector<8x64xf32>, vector<64x128xf32>, vector<8x128xf32> -> vector<8x128xf32>
    %18 = vector.broadcast %16 : vector<1x128xf32> to vector<8x128xf32>
    %19 = arith.addf %17, %18 : vector<8x128xf32>
    %c0_17 = arith.constant 0 : index
    %c0_18 = arith.constant 0 : index
    %20 = vector.load %arg8[%c0_17, %c0_18] : memref<8x128xf32, #tpu.memory_space<vmem>>, vector<8x128xf32>
    tpu.vector_store %arg8[%c0_17, %c0_18], %19 {strides = array<i32>} : memref<8x128xf32, #tpu.memory_space<vmem>>, vector<8x128xf32>,
    return
  }
  func.func @transform_0(%arg0: i32) -> (i32, i32) {
    %c0_i32 = arith.constant 0 : i32
    %c0_i32_0 = arith.constant 0 : i32
    return %arg0, %c0_i32 : i32, i32
  }
  func.func @transform_1(%arg0: i32) -> (i32, i32) {
    %c0_i32 = arith.constant 0 : i32
    %c0_i32_0 = arith.constant 0 : i32
    %c0_i32_1 = arith.constant 0 : i32
    return %c0_i32, %c0_i32_0 : i32, i32
  }
  func.func @transform_2(%arg0: i32) -> (i32, i32) {
    %c0_i32 = arith.constant 0 : i32
    %c0_i32_0 = arith.constant 0 : i32
    %c0_i32_1 = arith.constant 0 : i32
    return %c0_i32, %c0_i32_0 : i32, i32
  }
  func.func @transform_3(%arg0: i32) -> (i32, i32) {
    %c0_i32 = arith.constant 0 : i32
    %c0_i32_0 = arith.constant 0 : i32
    %c0_i32_1 = arith.constant 0 : i32
    return %c0_i32, %c0_i32_0 : i32, i32
  }
  func.func @transform_4(%arg0: i32) -> (i32, i32) {
    %c0_i32 = arith.constant 0 : i32
    %c0_i32_0 = arith.constant 0 : i32
    %c0_i32_1 = arith.constant 0 : i32
    return %c0_i32, %c0_i32_0 : i32, i32
  }
  func.func @transform_5(%arg0: i32) -> (i32, i32) {
    %c0_i32 = arith.constant 0 : i32
    %c0_i32_0 = arith.constant 0 : i32
    %c0_i32_1 = arith.constant 0 : i32
    return %c0_i32, %c0_i32_0 : i32, i32
  }
  func.func @transform_6(%arg0: i32) -> (i32, i32) {
    %c0_i32 = arith.constant 0 : i32
    %c0_i32_0 = arith.constant 0 : i32
    %c0_i32_1 = arith.constant 0 : i32
    return %c0_i32, %c0_i32_0 : i32, i32
  }
  func.func @transform_7(%arg0: i32) -> (i32, i32) {
    %c0_i32 = arith.constant 0 : i32
    %c0_i32_0 = arith.constant 0 : i32
    return %arg0, %c0_i32 : i32, i32
  }
}

</mosaic_0001>

<llo_original>
// kernel: tpu_custom_call.1
$region0: #{tpu_custom_call.1}
  #allocation0 [shape = 'u32[]', space=smem, size = 0x4, offset = 0x4, fixed_abs, tag = 'smem constant byte address 0x4 - core index']
  #allocation1 [shape = 'u32[144,128]{1,0:T(1,128)}', space=vmem, size = 0x12000, scoped, tag = 'internal scratch']
  %s0 = inlined_call_operand.hbm [shape: f32[8,32], index: 0, kind: input, shape index: {}]
  %s1 = inlined_call_operand.hbm [shape: f32[32,64], index: 1, kind: input, shape index: {}]
  %s2 = inlined_call_operand.vmem [shape: f32[1,64], index: 2, kind: input, shape index: {}]
  %s3 = inlined_call_operand.hbm [shape: f32[64,64], index: 3, kind: input, shape index: {}]
  %s4 = inlined_call_operand.vmem [shape: f32[1,64], index: 4, kind: input, shape index: {}]
  %s5 = inlined_call_operand.hbm [shape: f32[64,128], index: 5, kind: input, shape index: {}]
  %s6 = inlined_call_operand.vmem [shape: f32[1,128], index: 6, kind: input, shape index: {}]
  %s7 = inlined_call_operand.hbm [shape: f32[8,128], index: 7, kind: output, shape index: {}]
  %s8 = sld [smem:[#allocation0]]
  $region54: #{tpu_custom_call.1} parent=0
    _
  %s10 = ssub.s32 1, %s8
  %s11 = scalar_select 0, %s10, %s8
  $region1: #{tpu_custom_call.1} parent=0
    #allocation2 [shape = 'u8[4096]{0}', space=vmem, size = 0x1000, scoped, tag = 'input window, operand 0, single buffered']
    #allocation3 [shape = 's32[1]{0}', space=sflag, size = 0x4, scoped, tag = 'scoped memory for tpu_custom_call.1']
    #allocation4 [shape = 's32[1]{0}', space=sflag, size = 0x4, scoped, tag = 'scoped memory for tpu_custom_call.1']
    #allocation5 [shape = 'u8[16384]{0}', space=vmem, size = 0x4000, scoped, tag = 'input window, operand 1, single buffered']
    #allocation6 [shape = 's32[1]{0}', space=sflag, size = 0x4, scoped, tag = 'scoped memory for tpu_custom_call.1']
    #allocation7 [shape = 'u8[32768]{0}', space=vmem, size = 0x8000, scoped, tag = 'input window, operand 3, single buffered']
    #allocation8 [shape = 'u8[32768]{0}', space=vmem, size = 0x8000, scoped, tag = 'input window, operand 5, single buffered']
    #allocation9 [shape = 's32[1]{0}', space=sflag, size = 0x4, scoped, tag = 'scoped memory for tpu_custom_call.1']
    #allocation10 [shape = 'u8[4096]{0}', space=vmem, size = 0x1000, scoped, tag = 'output window, operand 0, single buffered']
    %12 = vsyncpa [#allocation3], 0
    %13 = vsyncpa [#allocation6], 0
    %14 = vsyncpa [#allocation9], 0
    %15 = vsyncpa [#allocation4], 0
    // Predicated region
    $region2: #{tpu_custom_call.1} parent=1 // pred_check
      _
    $region3: #{tpu_custom_call.1} parent=1 // pred_check_branch
      %17 = sbr.rel (0) target = $region5
    $region4: #{tpu_custom_call.1} parent=1 // pred_region
      %s19 = ssub.s32 128, 128
      %20 = vsyncadd [#allocation3], %s19
      %s22 = sshll.u32 [#allocation2], 4
      %s23 = int_to_ptr.vmem [resolvable:$true] %s22
      %25 = dma.hbm_to_vmem [thread:$0]  %s0, 128, %s23, [#allocation3]
    $region5: #{tpu_custom_call.1} parent=1 // pred_fallthru
      _
    // Predicated region
    $region6: #{tpu_custom_call.1} parent=1 // pred_check
      _
    $region7: #{tpu_custom_call.1} parent=1 // pred_check_branch
      %27 = sbr.rel (0) target = $region9
    $region8: #{tpu_custom_call.1} parent=1 // pred_region
      %s29 = ssub.s32 512, 512
      %30 = vsyncadd [#allocation6], %s29
      %s31 = sshll.u32 [#allocation5], 4
      %s32 = int_to_ptr.vmem [resolvable:$true] %s31
      %37 = dma.hbm_to_vmem [thread:$0]  %s1, 512, %s32, [#allocation6], 128, 128, 8
    $region9: #{tpu_custom_call.1} parent=1 // pred_fallthru
      _
    // Predicated region
    $region10: #{tpu_custom_call.1} parent=1 // pred_check
      _
    $region11: #{tpu_custom_call.1} parent=1 // pred_check_branch
      %39 = sbr.rel (0) target = $region13
    $region12: #{tpu_custom_call.1} parent=1 // pred_region
      _
    $region13: #{tpu_custom_call.1} parent=1 // pred_fallthru
      _
    // Predicated region
    $region14: #{tpu_custom_call.1} parent=1 // pred_check
      _
    $region15: #{tpu_custom_call.1} parent=1 // pred_check_branch
      %41 = sbr.rel (0) target = $region17
    $region16: #{tpu_custom_call.1} parent=1 // pred_region
      %s43 = ssub.s32 1024, 1024
      %44 = vsyncadd [#allocation6], %s43
      %s45 = sshll.u32 [#allocation7], 4
      %s46 = int_to_ptr.vmem [resolvable:$true] %s45
      %51 = dma.hbm_to_vmem [thread:$0]  %s3, 1024, %s46, [#allocation6], 128, 128, 8
    $region17: #{tpu_custom_call.1} parent=1 // pred_fallthru
      _
    // Predicated region
    $region18: #{tpu_custom_call.1} parent=1 // pred_check
      _
    $region19: #{tpu_custom_call.1} parent=1 // pred_check_branch
      %53 = sbr.rel (0) target = $region21
    $region20: #{tpu_custom_call.1} parent=1 // pred_region
      _
    $region21: #{tpu_custom_call.1} parent=1 // pred_fallthru
      _
    // Predicated region
    $region22: #{tpu_custom_call.1} parent=1 // pred_check
      _
    $region23: #{tpu_custom_call.1} parent=1 // pred_check_branch
      %55 = sbr.rel (0) target = $region25
    $region24: #{tpu_custom_call.1} parent=1 // pred_region
      %s57 = ssub.s32 1024, 1024
      %58 = vsyncadd [#allocation9], %s57
      %s59 = sshll.u32 [#allocation8], 4
      %s60 = int_to_ptr.vmem [resolvable:$true] %s59
      %65 = dma.hbm_to_vmem [thread:$0]  %s5, 1024, %s60, [#allocation9], 128, 128, 8
    $region25: #{tpu_custom_call.1} parent=1 // pred_fallthru
      _
    // Predicated region
    $region26: #{tpu_custom_call.1} parent=1 // pred_check
      _
    $region27: #{tpu_custom_call.1} parent=1 // pred_check_branch
      %67 = sbr.rel (0) target = $region29
    $region28: #{tpu_custom_call.1} parent=1 // pred_region
      _
    $region29: #{tpu_custom_call.1} parent=1 // pred_fallthru
      _
    // Predicated region
    $region30: #{tpu_custom_call.1} parent=1 // pred_check
      _
    $region31: #{tpu_custom_call.1} parent=1 // pred_check_branch
      %69 = sbr.rel (0) target = $region33
    $region32: #{tpu_custom_call.1} parent=1 // pred_region
      %70 = dma.done [#allocation3], 128
    $region33: #{tpu_custom_call.1} parent=1 // pred_fallthru
      _
    // Predicated region
    $region34: #{tpu_custom_call.1} parent=1 // pred_check
      _
    $region35: #{tpu_custom_call.1} parent=1 // pred_check_branch
      %72 = sbr.rel (0) target = $region37
    $region36: #{tpu_custom_call.1} parent=1 // pred_region
      %73 = dma.done [#allocation6], 512
    $region37: #{tpu_custom_call.1} parent=1 // pred_fallthru
      _
    // Predicated region
    $region38: #{tpu_custom_call.1} parent=1 // pred_check
      _
    $region39: #{tpu_custom_call.1} parent=1 // pred_check_branch
      %75 = sbr.rel (0) target = $region41
    $region40: #{tpu_custom_call.1} parent=1 // pred_region
      %76 = dma.done [#allocation6], 1024
    $region41: #{tpu_custom_call.1} parent=1 // pred_fallthru
      _
    // Predicated region
    $region42: #{tpu_custom_call.1} parent=1 // pred_check
      _
    $region43: #{tpu_custom_call.1} parent=1 // pred_check_branch
      %78 = sbr.rel (0) target = $region45
    $region44: #{tpu_custom_call.1} parent=1 // pred_region
      %79 = dma.done [#allocation9], 1024
    $region45: #{tpu_custom_call.1} parent=1 // pred_fallthru
      _
    %v80 = vld [vmem:[#allocation2] sm:$0xff]
    %v81 = vld [vmem:[#allocation5] sm:$0xff]
    %v82 = vld [vmem:[#allocation5 + $0x8] sm:$0xff]
    %v83 = vld [vmem:[#allocation5 + $0x10] sm:$0xff]
    %v84 = vld [vmem:[#allocation5 + $0x18] sm:$0xff]
    %v85 = vld [vmem:[%s2] sm:$0x1]
    %v87 = vlaneseq
    %v88 = vshrl.u32 %v87, 7
    %v89 = vsub.s32 0, %v88
    %v90 = vrot.slane %v85, %v89
    %vm92 = vcmask 261120
    %v94 = vsel %vm92, %v80, 0
    %96 = vmatprep.subr.mxu0 0.0
    %97 = vmatpush1.msra.mxu0 %v81
    %98 = vmatprep.subr.mxu0 0.0
    %99 = vmatpush1.msra.mxu0 %v82
    %100 = vmatprep.subr.mxu0 0.0
    %101 = vmatpush1.msra.mxu0 %v83
    %102 = vmatprep.subr.mxu0 0.0
    %103 = vmatpush1.msra.mxu0 %v84
    %104 = vmatprep.subr.mxu0 0.0
    %105 = vmatpush1.msra.mxu0 0.0
    %106 = vmatprep.subr.mxu0 0.0
    %107 = vmatpush1.msra.mxu0 0.0
    %108 = vmatprep.subr.mxu0 0.0
    %109 = vmatpush1.msra.mxu0 0.0
    %110 = vmatprep.subr.mxu0 0.0
    %111 = vmatpush1.msra.mxu0 0.0
    %112 = vmatprep.subr.mxu0 0.0
    %113 = vmatpush1.msra.mxu0 0.0
    %114 = vmatprep.subr.mxu0 0.0
    %115 = vmatpush1.msra.mxu0 0.0
    %116 = vmatprep.subr.mxu0 0.0
    %117 = vmatpush1.msra.mxu0 0.0
    %118 = vmatprep.subr.mxu0 0.0
    %119 = vmatpush1.msra.mxu0 0.0
    %120 = vmatprep.subr.mxu0 0.0
    %121 = vmatpush1.msra.mxu0 0.0
    %122 = vmatprep.subr.mxu0 0.0
    %123 = vmatpush1.msra.mxu0 0.0
    %124 = vmatprep.subr.mxu0 0.0
    %125 = vmatpush1.msra.mxu0 0.0
    %126 = vmatprep.subr.mxu0 0.0
    %127 = vmatpush1.msra.mxu0 0.0
    %128 = vmatprep.subr.mxu0 0.0
    %129 = vmatpush1.msra.mxu0 0.0
    %130 = vmatprep.subr.mxu0 0.0
    %131 = vmatpush1.msra.mxu0 0.0
    %132 = vmatprep.subr.mxu0 0.0
    %133 = vmatpush1.msra.mxu0 0.0
    %134 = vmatprep.subr.mxu0 0.0
    %135 = vmatpush1.msra.mxu0 0.0
    %136 = vmatprep.subr.mxu0 0.0
    %137 = vmatpush1.msra.mxu0 0.0
    %138 = vmatprep.subr.mxu0 0.0
    %139 = vmatpush1.msra.mxu0 0.0
    %140 = vmatprep.subr.mxu0 0.0
    %141 = vmatpush1.msra.mxu0 0.0
    %142 = vmatprep.subr.mxu0 0.0
    %143 = vmatpush1.msra.mxu0 0.0
    %144 = vmatprep.subr.mxu0 0.0
    %145 = vmatpush1.msra.mxu0 0.0
    %146 = vmatprep.subr.mxu0 0.0
    %147 = vmatpush1.msra.mxu0 0.0
    %148 = vmatprep.subr.mxu0 0.0
    %149 = vmatpush1.msra.mxu0 0.0
    %150 = vmatprep.subr.mxu0 0.0
    %151 = vmatpush1.msra.mxu0 0.0
    %152 = vmatprep.subr.mxu0 0.0
    %153 = vmatpush1.msra.mxu0 0.0
    %154 = vmatprep.subr.mxu0 0.0
    %155 = vmatpush1.msra.mxu0 0.0
    %156 = vmatprep.subr.mxu0 0.0
    %157 = vmatpush1.msra.mxu0 0.0
    %158 = vmatprep.subr.mxu0 0.0
    %159 = vmatpush1.msra.mxu0 0.0
    %160 = vmatprep.mubr.f32.mxu0 0.0
    %161 = vmatmul.mubr.f32.gmra.mrb[0].mxu0 %v94
    %v162 = vpop.f32.mrb[0].mxu0
    %v163 = vadd.f32 %v90, %v162
    %v164 = vpop.f32.mrb[0].mxu0
    %165 = vdwg.mxu0
    %v166 = vmax.f32 %v163, 0.0
    %v167 = vld [vmem:[#allocation7] sm:$0xff]
    %v168 = vld [vmem:[#allocation7 + $0x8] sm:$0xff]
    %v169 = vld [vmem:[#allocation7 + $0x10] sm:$0xff]
    %v170 = vld [vmem:[#allocation7 + $0x18] sm:$0xff]
    %v171 = vld [vmem:[#allocation7 + $0x20] sm:$0xff]
    %v172 = vld [vmem:[#allocation7 + $0x28] sm:$0xff]
    %v173 = vld [vmem:[#allocation7 + $0x30] sm:$0xff]
    %v174 = vld [vmem:[#allocation7 + $0x38] sm:$0xff]
    %v175 = vld [vmem:[%s4] sm:$0x1]
    %v177 = vlaneseq
    %v178 = vshrl.u32 %v177, 7
    %v179 = vsub.s32 0, %v178
    %v180 = vrot.slane %v175, %v179
    %vm182 = vcmask 523264
    %v184 = vsel %vm182, %v166, 0
    %186 = vmatprep.subr.mxu0 0.0
    %187 = vmatpush1.msra.mxu0 %v167
    %188 = vmatprep.subr.mxu0 0.0
    %189 = vmatpush1.msra.mxu0 %v168
    %190 = vmatprep.subr.mxu0 0.0
    %191 = vmatpush1.msra.mxu0 %v169
    %192 = vmatprep.subr.mxu0 0.0
    %193 = vmatpush1.msra.mxu0 %v170
    %194 = vmatprep.subr.mxu0 0.0
    %195 = vmatpush1.msra.mxu0 %v171
    %196 = vmatprep.subr.mxu0 0.0
    %197 = vmatpush1.msra.mxu0 %v172
    %198 = vmatprep.subr.mxu0 0.0
    %199 = vmatpush1.msra.mxu0 %v173
    %200 = vmatprep.subr.mxu0 0.0
    %201 = vmatpush1.msra.mxu0 %v174
    %202 = vmatprep.subr.mxu0 0.0
    %203 = vmatpush1.msra.mxu0 0.0
    %204 = vmatprep.subr.mxu0 0.0
    %205 = vmatpush1.msra.mxu0 0.0
    %206 = vmatprep.subr.mxu0 0.0
    %207 = vmatpush1.msra.mxu0 0.0
    %208 = vmatprep.subr.mxu0 0.0
    %209 = vmatpush1.msra.mxu0 0.0
    %210 = vmatprep.subr.mxu0 0.0
    %211 = vmatpush1.msra.mxu0 0.0
    %212 = vmatprep.subr.mxu0 0.0
    %213 = vmatpush1.msra.mxu0 0.0
    %214 = vmatprep.subr.mxu0 0.0
    %215 = vmatpush1.msra.mxu0 0.0
    %216 = vmatprep.subr.mxu0 0.0
    %217 = vmatpush1.msra.mxu0 0.0
    %218 = vmatprep.subr.mxu0 0.0
    %219 = vmatpush1.msra.mxu0 0.0
    %220 = vmatprep.subr.mxu0 0.0
    %221 = vmatpush1.msra.mxu0 0.0
    %222 = vmatprep.subr.mxu0 0.0
    %223 = vmatpush1.msra.mxu0 0.0
    %224 = vmatprep.subr.mxu0 0.0
    %225 = vmatpush1.msra.mxu0 0.0
    %226 = vmatprep.subr.mxu0 0.0
    %227 = vmatpush1.msra.mxu0 0.0
    %228 = vmatprep.subr.mxu0 0.0
    %229 = vmatpush1.msra.mxu0 0.0
    %230 = vmatprep.subr.mxu0 0.0
    %231 = vmatpush1.msra.mxu0 0.0
    %232 = vmatprep.subr.mxu0 0.0
    %233 = vmatpush1.msra.mxu0 0.0
    %234 = vmatprep.subr.mxu0 0.0
    %235 = vmatpush1.msra.mxu0 0.0
    %236 = vmatprep.subr.mxu0 0.0
    %237 = vmatpush1.msra.mxu0 0.0
    %238 = vmatprep.subr.mxu0 0.0
    %239 = vmatpush1.msra.mxu0 0.0
    %240 = vmatprep.subr.mxu0 0.0
    %241 = vmatpush1.msra.mxu0 0.0
    %242 = vmatprep.subr.mxu0 0.0
    %243 = vmatpush1.msra.mxu0 0.0
    %244 = vmatprep.subr.mxu0 0.0
    %245 = vmatpush1.msra.mxu0 0.0
    %246 = vmatprep.subr.mxu0 0.0
    %247 = vmatpush1.msra.mxu0 0.0
    %248 = vmatprep.subr.mxu0 0.0
    %249 = vmatpush1.msra.mxu0 0.0
    %250 = vmatprep.mubr.f32.mxu0 0.0
    %251 = vmatmul.mubr.f32.gmra.mrb[0].mxu0 %v184
    %v252 = vpop.f32.mrb[0].mxu0
    %v253 = vadd.f32 %v180, %v252
    %v254 = vpop.f32.mrb[0].mxu0
    %255 = vdwg.mxu0
    %v256 = vmax.f32 %v253, 0.0
    %v257 = vld [vmem:[#allocation8] sm:$0xff]
    %v258 = vld [vmem:[#allocation8 + $0x8] sm:$0xff]
    %v259 = vld [vmem:[#allocation8 + $0x10] sm:$0xff]
    %v260 = vld [vmem:[#allocation8 + $0x18] sm:$0xff]
    %v261 = vld [vmem:[#allocation8 + $0x20] sm:$0xff]
    %v262 = vld [vmem:[#allocation8 + $0x28] sm:$0xff]
    %v263 = vld [vmem:[#allocation8 + $0x30] sm:$0xff]
    %v264 = vld [vmem:[#allocation8 + $0x38] sm:$0xff]
    %v265 = vld [vmem:[%s6] sm:$0x1]
    %v267 = vlaneseq
    %v268 = vshrl.u32 %v267, 7
    %v269 = vsub.s32 0, %v268
    %v270 = vrot.slane %v265, %v269
    %v273 = vsel %vm182, %v256, 0
    %275 = vmatprep.subr.mxu0 0.0
    %276 = vmatpush1.msra.mxu0 %v257
    %277 = vmatprep.subr.mxu0 0.0
    %278 = vmatpush1.msra.mxu0 %v258
    %279 = vmatprep.subr.mxu0 0.0
    %280 = vmatpush1.msra.mxu0 %v259
    %281 = vmatprep.subr.mxu0 0.0
    %282 = vmatpush1.msra.mxu0 %v260
    %283 = vmatprep.subr.mxu0 0.0
    %284 = vmatpush1.msra.mxu0 %v261
    %285 = vmatprep.subr.mxu0 0.0
    %286 = vmatpush1.msra.mxu0 %v262
    %287 = vmatprep.subr.mxu0 0.0
    %288 = vmatpush1.msra.mxu0 %v263
    %289 = vmatprep.subr.mxu0 0.0
    %290 = vmatpush1.msra.mxu0 %v264
    %291 = vmatprep.subr.mxu0 0.0
    %292 = vmatpush1.msra.mxu0 0.0
    %293 = vmatprep.subr.mxu0 0.0
    %294 = vmatpush1.msra.mxu0 0.0
    %295 = vmatprep.subr.mxu0 0.0
    %296 = vmatpush1.msra.mxu0 0.0
    %297 = vmatprep.subr.mxu0 0.0
    %298 = vmatpush1.msra.mxu0 0.0
    %299 = vmatprep.subr.mxu0 0.0
    %300 = vmatpush1.msra.mxu0 0.0
    %301 = vmatprep.subr.mxu0 0.0
    %302 = vmatpush1.msra.mxu0 0.0
    %303 = vmatprep.subr.mxu0 0.0
    %304 = vmatpush1.msra.mxu0 0.0
    %305 = vmatprep.subr.mxu0 0.0
    %306 = vmatpush1.msra.mxu0 0.0
    %307 = vmatprep.subr.mxu0 0.0
    %308 = vmatpush1.msra.mxu0 0.0
    %309 = vmatprep.subr.mxu0 0.0
    %310 = vmatpush1.msra.mxu0 0.0
    %311 = vmatprep.subr.mxu0 0.0
    %312 = vmatpush1.msra.mxu0 0.0
    %313 = vmatprep.subr.mxu0 0.0
    %314 = vmatpush1.msra.mxu0 0.0
    %315 = vmatprep.subr.mxu0 0.0
    %316 = vmatpush1.msra.mxu0 0.0
    %317 = vmatprep.subr.mxu0 0.0
    %318 = vmatpush1.msra.mxu0 0.0
    %319 = vmatprep.subr.mxu0 0.0
    %320 = vmatpush1.msra.mxu0 0.0
    %321 = vmatprep.subr.mxu0 0.0
    %322 = vmatpush1.msra.mxu0 0.0
    %323 = vmatprep.subr.mxu0 0.0
    %324 = vmatpush1.msra.mxu0 0.0
    %325 = vmatprep.subr.mxu0 0.0
    %326 = vmatpush1.msra.mxu0 0.0
    %327 = vmatprep.subr.mxu0 0.0
    %328 = vmatpush1.msra.mxu0 0.0
    %329 = vmatprep.subr.mxu0 0.0
    %330 = vmatpush1.msra.mxu0 0.0
    %331 = vmatprep.subr.mxu0 0.0
    %332 = vmatpush1.msra.mxu0 0.0
    %333 = vmatprep.subr.mxu0 0.0
    %334 = vmatpush1.msra.mxu0 0.0
    %335 = vmatprep.subr.mxu0 0.0
    %336 = vmatpush1.msra.mxu0 0.0
    %337 = vmatprep.subr.mxu0 0.0
    %338 = vmatpush1.msra.mxu0 0.0
    %339 = vmatprep.mubr.f32.mxu0 0.0
    %340 = vmatmul.mubr.f32.gmra.mrb[0].mxu0 %v273
    %v341 = vpop.f32.mrb[0].mxu0
    %v342 = vadd.f32 %v270, %v341
    %v343 = vpop.f32.mrb[0].mxu0
    %344 = vdwg.mxu0
    %345 = vst [vmem:[#allocation10] sm:$0xff] %v342
    // Predicated region
    $region46: #{tpu_custom_call.1} parent=1 // pred_check
      _
    $region47: #{tpu_custom_call.1} parent=1 // pred_check_branch
      %347 = sbr.rel (0) target = $region49
    $region48: #{tpu_custom_call.1} parent=1 // pred_region
      %s349 = ssub.s32 128, 128
      %350 = vsyncadd [#allocation4], %s349
      %s352 = sshll.u32 [#allocation10], 4
      %s353 = int_to_ptr.vmem [resolvable:$true] %s352
      %355 = dma.vmem_to_hbm [thread:$0]  %s353, 128, %s7, [#allocation4]
    $region49: #{tpu_custom_call.1} parent=1 // pred_fallthru
      _
    // Predicated region
    $region50: #{tpu_custom_call.1} parent=1 // pred_check
      _
    $region51: #{tpu_custom_call.1} parent=1 // pred_check_branch
      %357 = sbr.rel (0) target = $region53
    $region52: #{tpu_custom_call.1} parent=1 // pred_region
      %358 = dma.done [#allocation4], 128
    $region53: #{tpu_custom_call.1} parent=1 // pred_fallthru
      _
    %359 = vsyncpa [#allocation3], 1
    %360 = vsyncpa [#allocation6], 1
    %361 = vsyncpa [#allocation9], 1
    %362 = vsyncpa [#allocation4], 1

</llo_original>
